<compile_context>
chip_gen: v7x
topology: tpu7x:2x2x1
jax: 0.10.0
libtpu: 0.0.40
codegen_flags: <defaults>
</compile_context>

<pallas_src>
import jax
import jax.numpy as jnp
from jax.experimental import pallas as pl
from jax.experimental.pallas import tpu as pltpu


def _round_up(x, m):
    return ((x + m - 1) // m) * m


def _cdiv(a, b):
    return -(-a // b)


def _pick_thw(hw, max_rows=1024):
    """Adaptive HW tile: >=2 tiles, <= ~max_rows rows, multiple of 8."""
    n_tiles = max(2, _cdiv(hw, max_rows))
    return _round_up(_cdiv(hw, n_tiles), 8)


def lraspp_head_kernel(h_ref, w1_ref, bn_b_ref, s_ref, w3_ref, b3_ref, out_ref):
    """One grid step = one (sample, HW-row-tile) pair.

    h_ref    : (THW, C)       bf16 flattened NHWC high features (row tile)
    w1_ref   : (C, CI_pad)    bf16 cbr weight with BN scale pre-folded
    bn_b_ref : (1, CI_pad)    f32  folded BN bias
    s_ref    : (1, CI_pad)    f32  per-sample sigmoid gate (scale branch)
    w3_ref   : (CI_pad, NC)   bf16 classifier weight
    b3_ref   : (1, NC)        f32  classifier bias
    out_ref  : (THW, NC)      bf16 logits
    """
    # cbr: 1x1 conv (BN scale folded into W1) -> + folded BN bias -> ReLU
    y = jnp.dot(h_ref[...], w1_ref[...], preferred_element_type=jnp.float32)
    # gate applied in f32 (VPU op, free under the DMA/MXU bottleneck)
    y = jnp.maximum(y + bn_b_ref[...], 0.0) * s_ref[...]
    # high_classifier: 1x1 conv + bias
    out = jnp.dot(y.astype(w3_ref.dtype), w3_ref[...],
                  preferred_element_type=jnp.float32)
    out_ref[...] = (out + b3_ref[...]).astype(out_ref.dtype)


def lraspp_head_nhwc(hf, params):
    """hf: (N, HW, C) bfloat16 flattened NHWC 'high' features.

    Backbones that already emit NHWC bf16 should call this directly and skip
    the layout pass in `lraspp_forward`. Returns (N, HW, NC) bf16 logits.
    """
    w1, bn_scale, bn_bias, w2, w3, b3 = params
    N, HW, C = hf.shape
    CI = w1.shape[0]
    NC = w3.shape[0]
    CI_pad = _round_up(CI, 128)          # lane-dense intermediate

    THW = _pick_thw(HW)
    HW_pad = _round_up(HW, THW)

    # ---- scale branch (global mean -> 1x1 conv -> sigmoid); tiny M=N matmul,
    #      computed from the same NHWC bf16 tensor the kernel reads.
    pooled = jnp.mean(hf, axis=1, dtype=jnp.float32)              # (N, C)
    s = jax.nn.sigmoid(pooled @ w2.T)                             # (N, CI)
    s_p = jnp.pad(s, ((0, 0), (0, CI_pad - CI))).reshape(N, 1, CI_pad)

    # ---- tiny one-time weight prep (BN scale folded into W1 columns)
    w1_eff = w1.T * bn_scale[None, :]                             # (C, CI)
    w1_p = jnp.pad(w1_eff, ((0, 0), (0, CI_pad - CI))).astype(jnp.bfloat16)
    bn_b_p = jnp.pad(bn_bias, (0, CI_pad - CI)).reshape(1, CI_pad)
    w3_p = jnp.pad(w3.T, ((0, CI_pad - CI), (0, 0))).astype(jnp.bfloat16)
    b3_p = b3.reshape(1, NC)

    # ---- row-pad HW only when the adaptive tile doesn't divide it.
    # TODO(synk): use Pallas ragged-boundary tiles to drop this copy entirely.
    if HW_pad != HW:
        hf = jnp.pad(hf, ((0, 0), (0, HW_pad - HW), (0, 0)))

    grid = (N, HW_pad // THW)
    flops = 2 * N * HW_pad * CI_pad * (C + NC)
    bytes_accessed = (hf.size * 2 + w1_p.size * 2 + w3_p.size * 2 +
                      (bn_b_p.size + s_p.size + b3_p.size) * 4 +
                      N * HW_pad * NC * 2)

    out_flat = pl.pallas_call(
        lraspp_head_kernel,
        out_shape=jax.ShapeDtypeStruct((N, HW_pad, NC), jnp.bfloat16),
        grid_spec=pltpu.PrefetchScalarGridSpec(
            num_scalar_prefetch=0,
            grid=grid,
            in_specs=[
                pl.BlockSpec((pl.Squeezed(), THW, C),
                             lambda n, t: (n, t, 0)),                 # high tile
                pl.BlockSpec((C, CI_pad), lambda n, t: (0, 0)),       # W1*bn_scale
                pl.BlockSpec((1, CI_pad), lambda n, t: (0, 0)),       # BN bias
                pl.BlockSpec((pl.Squeezed(), 1, CI_pad),
                             lambda n, t: (n, 0, 0)),                 # gate s
                pl.BlockSpec((CI_pad, NC), lambda n, t: (0, 0)),      # W3
                pl.BlockSpec((1, NC), lambda n, t: (0, 0)),           # b3
            ],
            out_specs=pl.BlockSpec((pl.Squeezed(), THW, NC),
                                   lambda n, t: (n, t, 0)),
        ),
        compiler_params=pltpu.CompilerParams(
            dimension_semantics=("parallel", "parallel")),
        cost_estimate=pl.CostEstimate(flops=flops, transcendentals=0,
                                      bytes_accessed=bytes_accessed),
    )(hf, w1_p, bn_b_p, s_p, w3_p, b3_p)

    return out_flat[:, :HW, :]                                    # (N, HW, NC)


def lraspp_forward(high_nchw, params):
    """high_nchw: (N, C_high, H, W) float32. Returns {'out': (N, NC, H, W)}."""
    w3 = params[4]
    N, C, H, W = high_nchw.shape
    NC = w3.shape[0]
    # single fused NCHW->NHWC transpose + bf16 cast (the only full-tensor pass
    # outside the kernel)
    hf = jnp.transpose(high_nchw, (0, 2, 3, 1)).astype(jnp.bfloat16)
    out = lraspp_head_nhwc(hf.reshape(N, H * W, C), params)       # (N, HW, NC) bf16
    # small logits tensor: back to NCHW f32 to match the torch module's output
    out = out.reshape(N, H, W, NC).transpose(0, 3, 1, 2).astype(jnp.float32)
    return {"out": out}


def init_params(key, c_high, c_inter, num_classes):
    k1, k2, k3, k4, k5, k6, k7, k8 = jax.random.split(key, 8)
    # cbr conv: Conv2d(C_high, C_inter, 1, bias=False)
    w1 = jax.random.normal(k1, (c_inter, c_high), jnp.float32) * 0.05
    # BatchNorm2d(C_inter) eval-mode parameters, folded to scale/bias
    gamma = 0.5 + jax.random.uniform(k2, (c_inter,), jnp.float32)
    beta = jax.random.normal(k3, (c_inter,), jnp.float32) * 0.1
    running_mean = jax.random.normal(k4, (c_inter,), jnp.float32) * 0.1
    running_var = 0.5 + jax.random.uniform(k5, (c_inter,), jnp.float32)
    eps = 1e-5
    bn_scale = gamma / jnp.sqrt(running_var + eps)          # (c_inter,)
    bn_bias = beta - running_mean * bn_scale                # (c_inter,)
    # scale conv: Conv2d(C_high, C_inter, 1, bias=False)
    w2 = jax.random.normal(k6, (c_inter, c_high), jnp.float32) * 0.05
    # high_classifier: Conv2d(C_inter, num_classes, 1) with bias
    w3 = jax.random.normal(k7, (num_classes, c_inter), jnp.float32) * 0.05
    b3 = jax.random.normal(k8, (num_classes,), jnp.float32) * 0.1
    # NOTE: low_classifier exists in __init__ but is unused by this forward.
    return (w1, bn_scale, bn_bias, w2, w3, b3)


def reference_forward(high_nchw, params):
    """Plain-JAX reference mirroring the kernel math (bf16 MXU inputs, f32 acc,
    f32 gate multiply, bf16 output quantization)."""
    w1, bn_scale, bn_bias, w2, w3, b3 = params
    N, C, H, W = high_nchw.shape
    hf = jnp.transpose(high_nchw, (0, 2, 3, 1)).astype(jnp.bfloat16)   # (N,H,W,C)
    pooled = jnp.mean(hf.reshape(N, H * W, C), axis=1, dtype=jnp.float32)
    s = jax.nn.sigmoid(pooled @ w2.T)                                   # (N,Ci)
    w1_eff = (w1.T * bn_scale[None, :]).astype(jnp.bfloat16)
    y = jnp.dot(hf, w1_eff, preferred_element_type=jnp.float32)
    y = jnp.maximum(y + bn_bias, 0.0) * s[:, None, None, :]
    out = jnp.dot(y.astype(jnp.bfloat16), w3.T.astype(jnp.bfloat16),
                  preferred_element_type=jnp.float32) + b3
    out = out.astype(jnp.bfloat16).astype(jnp.float32)
    return jnp.transpose(out, (0, 3, 1, 2))


if __name__ == "__main__":
    # Small shapes consistent with the head (stand-in for backbone 'high').
    N, C_HIGH, H, W = 2, 32, 8, 8
    C_INTER, NUM_CLASSES = 16, 8

    key = jax.random.PRNGKey(0)
    k_in, k_par = jax.random.split(key)
    high = jax.random.normal(k_in, (N, C_HIGH, H, W), jnp.float32)
    params = init_params(k_par, C_HIGH, C_INTER, NUM_CLASSES)

    result = lraspp_forward(high, params)
    out = jax.block_until_ready(result["out"])

    ref = reference_forward(high, params)
    assert out.shape == (N, NUM_CLASSES, H, W)
    max_err = float(jnp.max(jnp.abs(out - ref)))
    assert jnp.allclose(out, ref, atol=3e-2, rtol=3e-2), max_err
    print("KERNEL_OK")
</pallas_src>

<mosaic_0001>
module attributes {stable_mosaic.version = 11 : i64} {
  func.func @lraspp_head_kernel(%arg0: i32, %arg1: i32, %arg2: memref<1x32x32xbf16, #tpu.memory_space<vmem>>, %arg3: memref<32x128xbf16, #tpu.memory_space<vmem>>, %arg4: memref<1x128xf32, #tpu.memory_space<vmem>>, %arg5: memref<1x1x128xf32, #tpu.memory_space<vmem>>, %arg6: memref<128x8xbf16, #tpu.memory_space<vmem>>, %arg7: memref<1x8xf32, #tpu.memory_space<vmem>>, %arg8: memref<1x32x8xbf16, #tpu.memory_space<vmem>>) attributes {dimension_semantics = [#tpu.dimension_semantics<parallel>, #tpu.dimension_semantics<parallel>], iteration_bounds = array<i64: 2, 2>, scalar_prefetch = 0 : i64, scratch_operands = 0 : i64, tpu.core_type = #tpu.core_type<tc>, window_params = [{transform_indices = @transform_0, window_bounds = array<i64: 1, 32, 32>}, {pipeline_mode = #tpu.pipeline_mode<synchronous>, transform_indices = @transform_1, window_bounds = array<i64: 32, 128>}, {pipeline_mode = #tpu.pipeline_mode<synchronous>, transform_indices = @transform_2, window_bounds = array<i64: 1, 128>}, {transform_indices = @transform_3, window_bounds = array<i64: 1, 1, 128>}, {pipeline_mode = #tpu.pipeline_mode<synchronous>, transform_indices = @transform_4, window_bounds = array<i64: 128, 8>}, {pipeline_mode = #tpu.pipeline_mode<synchronous>, transform_indices = @transform_5, window_bounds = array<i64: 1, 8>}, {transform_indices = @transform_6, window_bounds = array<i64: 1, 32, 8>}]} {
    %c0 = arith.constant 0 : index
    %c0_0 = arith.constant 0 : index
    %c0_1 = arith.constant 0 : index
    %0 = vector.load %arg2[%c0, %c0_0, %c0_1] : memref<1x32x32xbf16, #tpu.memory_space<vmem>>, vector<1x32x32xbf16>
    %1 = vector.shape_cast %0 : vector<1x32x32xbf16> to vector<32x32xbf16>
    %c0_2 = arith.constant 0 : index
    %c0_3 = arith.constant 0 : index
    %2 = vector.load %arg3[%c0_2, %c0_3] : memref<32x128xbf16, #tpu.memory_space<vmem>>, vector<32x128xbf16>
    %cst = arith.constant dense<0.000000e+00> : vector<32x128xf32>
    %3 = tpu.matmul %1, %2, %cst {dimension_numbers = #tpu.dot_dimension_numbers<[1], [0], [0], [1], [0, 0, 1, 1], [], []>} : vector<32x32xbf16>, vector<32x128xbf16>, vector<32x128xf32> -> vector<32x128xf32>
    %c0_4 = arith.constant 0 : index
    %c0_5 = arith.constant 0 : index
    %4 = vector.load %arg4[%c0_4, %c0_5] : memref<1x128xf32, #tpu.memory_space<vmem>>, vector<1x128xf32>
    %5 = vector.broadcast %4 : vector<1x128xf32> to vector<32x128xf32>
    %6 = arith.addf %3, %5 : vector<32x128xf32>
    %cst_6 = arith.constant 0.000000e+00 : f32
    %7 = vector.broadcast %cst_6 : f32 to vector<32x128xf32>
    %8 = arith.maximumf %6, %7 : vector<32x128xf32>
    %c0_7 = arith.constant 0 : index
    %c0_8 = arith.constant 0 : index
    %c0_9 = arith.constant 0 : index
    %9 = vector.load %arg5[%c0_7, %c0_8, %c0_9] : memref<1x1x128xf32, #tpu.memory_space<vmem>>, vector<1x1x128xf32>
    %10 = vector.shape_cast %9 : vector<1x1x128xf32> to vector<1x128xf32>
    %11 = vector.broadcast %10 : vector<1x128xf32> to vector<32x128xf32>
    %12 = arith.mulf %8, %11 : vector<32x128xf32>
    %13 = arith.truncf %12 : vector<32x128xf32> to vector<32x128xbf16>
    %c0_10 = arith.constant 0 : index
    %c0_11 = arith.constant 0 : index
    %14 = vector.load %arg6[%c0_10, %c0_11] : memref<128x8xbf16, #tpu.memory_space<vmem>>, vector<128x8xbf16>
    %cst_12 = arith.constant dense<0.000000e+00> : vector<32x8xf32>
    %15 = tpu.matmul %13, %14, %cst_12 {dimension_numbers = #tpu.dot_dimension_numbers<[1], [0], [0], [1], [0, 0, 1, 1], [], []>} : vector<32x128xbf16>, vector<128x8xbf16>, vector<32x8xf32> -> vector<32x8xf32>
    %c0_13 = arith.constant 0 : index
    %c0_14 = arith.constant 0 : index
    %16 = vector.load %arg7[%c0_13, %c0_14] : memref<1x8xf32, #tpu.memory_space<vmem>>, vector<1x8xf32>
    %17 = vector.broadcast %16 : vector<1x8xf32> to vector<32x8xf32>
    %18 = arith.addf %15, %17 : vector<32x8xf32>
    %19 = arith.truncf %18 : vector<32x8xf32> to vector<32x8xbf16>
    %c0_15 = arith.constant 0 : index
    %c0_16 = arith.constant 0 : index
    %c0_17 = arith.constant 0 : index
    %20 = vector.load %arg8[%c0_15, %c0_16, %c0_17] : memref<1x32x8xbf16, #tpu.memory_space<vmem>>, vector<1x32x8xbf16>
    %21 = vector.shape_cast %20 : vector<1x32x8xbf16> to vector<32x8xbf16>
    %22 = vector.shape_cast %19 : vector<32x8xbf16> to vector<1x32x8xbf16>
    tpu.vector_store %arg8[%c0_15, %c0_16, %c0_17], %22 {strides = array<i32>} : memref<1x32x8xbf16, #tpu.memory_space<vmem>>, vector<1x32x8xbf16>,
    return
  }
  func.func @transform_0(%arg0: i32, %arg1: i32) -> (i32, i32, i32) {
    %c0_i32 = arith.constant 0 : i32
    %c0_i32_0 = arith.constant 0 : i32
    return %arg0, %arg1, %c0_i32 : i32, i32, i32
  }
  func.func @transform_1(%arg0: i32, %arg1: i32) -> (i32, i32) {
    %c0_i32 = arith.constant 0 : i32
    %c0_i32_0 = arith.constant 0 : i32
    %c0_i32_1 = arith.constant 0 : i32
    return %c0_i32, %c0_i32_0 : i32, i32
  }
  func.func @transform_2(%arg0: i32, %arg1: i32) -> (i32, i32) {
    %c0_i32 = arith.constant 0 : i32
    %c0_i32_0 = arith.constant 0 : i32
    %c0_i32_1 = arith.constant 0 : i32
    return %c0_i32, %c0_i32_0 : i32, i32
  }
  func.func @transform_3(%arg0: i32, %arg1: i32) -> (i32, i32, i32) {
    %c0_i32 = arith.constant 0 : i32
    %c0_i32_0 = arith.constant 0 : i32
    %c0_i32_1 = arith.constant 0 : i32
    return %arg0, %c0_i32, %c0_i32_0 : i32, i32, i32
  }
  func.func @transform_4(%arg0: i32, %arg1: i32) -> (i32, i32) {
    %c0_i32 = arith.constant 0 : i32
    %c0_i32_0 = arith.constant 0 : i32
    %c0_i32_1 = arith.constant 0 : i32
    return %c0_i32, %c0_i32_0 : i32, i32
  }
  func.func @transform_5(%arg0: i32, %arg1: i32) -> (i32, i32) {
    %c0_i32 = arith.constant 0 : i32
    %c0_i32_0 = arith.constant 0 : i32
    %c0_i32_1 = arith.constant 0 : i32
    return %c0_i32, %c0_i32_0 : i32, i32
  }
  func.func @transform_6(%arg0: i32, %arg1: i32) -> (i32, i32, i32) {
    %c0_i32 = arith.constant 0 : i32
    %c0_i32_0 = arith.constant 0 : i32
    return %arg0, %arg1, %c0_i32 : i32, i32, i32
  }
}

</mosaic_0001>

<llo_original>
// kernel: tpu_custom_call.1
$region0: #{tpu_custom_call.1}
  #allocation0 [shape = 'u32[]', space=smem, size = 0x4, offset = 0x4, fixed_abs, tag = 'smem constant byte address 0x4 - core index']
  #allocation1 [shape = 'u32[144,128]{1,0:T(1,128)}', space=vmem, size = 0x12000, scoped, tag = 'internal scratch']
  %s0 = inlined_call_operand.vmem [shape: bf16[2,64,32], index: 0, kind: input, shape index: {}]
  %s1 = inlined_call_operand.vmem [shape: bf16[32,128], index: 1, kind: input, shape index: {}]
  %s2 = inlined_call_operand.vmem [shape: f32[1,128], index: 2, kind: input, shape index: {}]
  %s3 = inlined_call_operand.vmem [shape: f32[2,1,128], index: 3, kind: input, shape index: {}]
  %s4 = inlined_call_operand.vmem [shape: bf16[128,8], index: 4, kind: input, shape index: {}]
  %s5 = inlined_call_operand.vmem [shape: f32[1,8], index: 5, kind: input, shape index: {}]
  %s6 = inlined_call_operand.vmem [shape: bf16[2,64,8], index: 6, kind: output, shape index: {}]
  %s7 = sld [smem:[#allocation0]]
  $region57: #{tpu_custom_call.1} parent=0
    _
  %s9 = ssub.s32 1, %s7
  %s10 = scalar_select 0, %s9, %s7
  loop: start=0, step=1, limit=6
  $region2: #{tpu_custom_call.1} parent=0 // loop_pre_header
    _
  $region3: #{tpu_custom_call.1} parent=0 // loop_header
    %s12 = sphi 0, %s16
    %p13 = scmp.ge.s32.totalorder %s12, 6
    %s19 = sphi 0, %s31
    %s20 = sphi 0, %s27
    %s21 = sphi 0, %s19
    %s22 = sphi 0, %s20
    %s23 = sphi 0, %s21
    %s24 = sphi 0, %s22
    %s36 = sphi 0, %s38
    %s39 = sphi 0, %s36
    %s40 = sphi 0, %s39
    %s56 = sphi 0, %s40
    %s60 = sphi 0, %s60
    %s62 = sphi 0, %s60
    %s63 = sphi 0, %s62
    %s77 = sphi 0, %s63
    %s81 = sphi 0, %s81
    %s83 = sphi 0, %s81
    %s84 = sphi 0, %s83
    %s98 = sphi 0, %s84
    %s104 = sphi 0, %s106
    %s107 = sphi 0, %s104
    %s108 = sphi 0, %s107
    %s124 = sphi 0, %s108
    %s128 = sphi 0, %s128
    %s130 = sphi 0, %s128
    %s131 = sphi 0, %s130
    %s145 = sphi 0, %s131
    %s149 = sphi 0, %s149
    %s151 = sphi 0, %s149
    %s152 = sphi 0, %s151
    %s166 = sphi 0, %s152
    %s174 = sphi 0, %s176
    %s177 = sphi 0, %s174
    %s178 = sphi 0, %s177
    %s194 = sphi 0, %s178
  $region4: #{tpu_custom_call.1} parent=0 // loop_header_branch
    %15 = sbr.rel (%p13) target = $region8
  $region5: #{tpu_custom_call.1} parent=0 // loop_body
    %s17 = ssub.s32 %s12, 1
    %s18 = ssub.s32 %s12, 2
    %s25 = sadd.s32 1, %s20
    %p26 = scmp.ge.s32.totalorder %s25, 2
    %s27 = scalar_select %p26, 0, %s25
    %s28 = sadd.s32 1, %s19
    %s29 = scalar_select %p26, %s28, %s19
    %p30 = scmp.ge.s32.totalorder %s29, 2
    %s31 = scalar_select %p30, 0, %s29
    %s32 = ssub.s32 %s19, %s31
    %s33 = ssub.s32 %s20, %s27
    %s34 = sor.u32 %s32, %s33
    %p35 = scmp.eq.s32.totalorder %s34, 0
    %s37 = sadd.s32 %s36, 1
    %s38 = scalar_select %p35, %s36, %s37
    %p41 = pneg %p35
    %p42 = scmp.eq.s32.totalorder %s12, 3
    %p43 = por %p41, %p42
    %p44 = scmp.ne.s32.totalorder %s36, %s39
    %p45 = scmp.eq.s32.totalorder %s12, 0
    %p46 = por %p44, %p45
    %p47 = scmp.ne.s32.totalorder %s36, %s39
    %p48 = scmp.eq.s32.totalorder %s17, 3
    %p49 = por %p47, %p48
    %p50 = scmp.ne.s32.totalorder %s39, %s40
    %p51 = scmp.eq.s32.totalorder %s17, 0
    %p52 = por %p50, %p51
    %p53 = scmp.ne.s32.totalorder %s39, %s40
    %p54 = scmp.eq.s32.totalorder %s18, 3
    %p55 = por %p53, %p54
    %p57 = scmp.ne.s32.totalorder %s40, %s56
    %p58 = scmp.eq.s32.totalorder %s18, 0
    %p59 = por %p57, %p58
    %s61 = sadd.s32 %s60, 1
    %p64 = scmp.eq.s32.totalorder %s12, 3
    %p65 = scmp.ne.s32.totalorder %s60, %s62
    %p66 = scmp.eq.s32.totalorder %s12, 0
    %p67 = por %p65, %p66
    %p68 = scmp.ne.s32.totalorder %s60, %s62
    %p69 = scmp.eq.s32.totalorder %s17, 3
    %p70 = por %p68, %p69
    %p71 = scmp.ne.s32.totalorder %s62, %s63
    %p72 = scmp.eq.s32.totalorder %s17, 0
    %p73 = por %p71, %p72
    %p74 = scmp.ne.s32.totalorder %s62, %s63
    %p75 = scmp.eq.s32.totalorder %s18, 3
    %p76 = por %p74, %p75
    %p78 = scmp.ne.s32.totalorder %s63, %s77
    %p79 = scmp.eq.s32.totalorder %s18, 0
    %p80 = por %p78, %p79
    %s82 = sadd.s32 %s81, 1
    %p85 = scmp.eq.s32.totalorder %s12, 3
    %p86 = scmp.ne.s32.totalorder %s81, %s83
    %p87 = scmp.eq.s32.totalorder %s12, 0
    %p88 = por %p86, %p87
    %p89 = scmp.ne.s32.totalorder %s81, %s83
    %p90 = scmp.eq.s32.totalorder %s17, 3
    %p91 = por %p89, %p90
    %p92 = scmp.ne.s32.totalorder %s83, %s84
    %p93 = scmp.eq.s32.totalorder %s17, 0
    %p94 = por %p92, %p93
    %p95 = scmp.ne.s32.totalorder %s83, %s84
    %p96 = scmp.eq.s32.totalorder %s18, 3
    %p97 = por %p95, %p96
    %p99 = scmp.ne.s32.totalorder %s84, %s98
    %p100 = scmp.eq.s32.totalorder %s18, 0
    %p101 = por %p99, %p100
    %s102 = ssub.s32 %s19, %s31
    %p103 = scmp.eq.s32.totalorder %s102, 0
    %s105 = sadd.s32 %s104, 1
    %s106 = scalar_select %p103, %s104, %s105
    %p109 = pneg %p103
    %p110 = scmp.eq.s32.totalorder %s12, 3
    %p111 = por %p109, %p110
    %p112 = scmp.ne.s32.totalorder %s104, %s107
    %p113 = scmp.eq.s32.totalorder %s12, 0
    %p114 = por %p112, %p113
    %p115 = scmp.ne.s32.totalorder %s104, %s107
    %p116 = scmp.eq.s32.totalorder %s17, 3
    %p117 = por %p115, %p116
    %p118 = scmp.ne.s32.totalorder %s107, %s108
    %p119 = scmp.eq.s32.totalorder %s17, 0
    %p120 = por %p118, %p119
    %p121 = scmp.ne.s32.totalorder %s107, %s108
    %p122 = scmp.eq.s32.totalorder %s18, 3
    %p123 = por %p121, %p122
    %p125 = scmp.ne.s32.totalorder %s108, %s124
    %p126 = scmp.eq.s32.totalorder %s18, 0
    %p127 = por %p125, %p126
    %s129 = sadd.s32 %s128, 1
    %p132 = scmp.eq.s32.totalorder %s12, 3
    %p133 = scmp.ne.s32.totalorder %s128, %s130
    %p134 = scmp.eq.s32.totalorder %s12, 0
    %p135 = por %p133, %p134
    %p136 = scmp.ne.s32.totalorder %s128, %s130
    %p137 = scmp.eq.s32.totalorder %s17, 3
    %p138 = por %p136, %p137
    %p139 = scmp.ne.s32.totalorder %s130, %s131
    %p140 = scmp.eq.s32.totalorder %s17, 0
    %p141 = por %p139, %p140
    %p142 = scmp.ne.s32.totalorder %s130, %s131
    %p143 = scmp.eq.s32.totalorder %s18, 3
    %p144 = por %p142, %p143
    %p146 = scmp.ne.s32.totalorder %s131, %s145
    %p147 = scmp.eq.s32.totalorder %s18, 0
    %p148 = por %p146, %p147
    %s150 = sadd.s32 %s149, 1
    %p153 = scmp.eq.s32.totalorder %s12, 3
    %p154 = scmp.ne.s32.totalorder %s149, %s151
    %p155 = scmp.eq.s32.totalorder %s12, 0
    %p156 = por %p154, %p155
    %p157 = scmp.ne.s32.totalorder %s149, %s151
    %p158 = scmp.eq.s32.totalorder %s17, 3
    %p159 = por %p157, %p158
    %p160 = scmp.ne.s32.totalorder %s151, %s152
    %p161 = scmp.eq.s32.totalorder %s17, 0
    %p162 = por %p160, %p161
    %p163 = scmp.ne.s32.totalorder %s151, %s152
    %p164 = scmp.eq.s32.totalorder %s18, 3
    %p165 = por %p163, %p164
    %p167 = scmp.ne.s32.totalorder %s152, %s166
    %p168 = scmp.eq.s32.totalorder %s18, 0
    %p169 = por %p167, %p168
    %s170 = ssub.s32 %s19, %s31
    %s171 = ssub.s32 %s20, %s27
    %s172 = sor.u32 %s170, %s171
    %p173 = scmp.eq.s32.totalorder %s172, 0
    %s175 = sadd.s32 %s174, 1
    %s176 = scalar_select %p173, %s174, %s175
    %p179 = pneg %p173
    %p180 = scmp.eq.s32.totalorder %s12, 3
    %p181 = por %p179, %p180
    %p182 = scmp.ne.s32.totalorder %s174, %s177
    %p183 = scmp.eq.s32.totalorder %s12, 0
    %p184 = por %p182, %p183
    %p185 = scmp.ne.s32.totalorder %s174, %s177
    %p186 = scmp.eq.s32.totalorder %s17, 3
    %p187 = por %p185, %p186
    %p188 = scmp.ne.s32.totalorder %s177, %s178
    %p189 = scmp.eq.s32.totalorder %s17, 0
    %p190 = por %p188, %p189
    %p191 = scmp.ne.s32.totalorder %s177, %s178
    %p192 = scmp.eq.s32.totalorder %s18, 3
    %p193 = por %p191, %p192
    %p195 = scmp.ne.s32.totalorder %s178, %s194
    %p196 = scmp.eq.s32.totalorder %s18, 0
    %p197 = por %p195, %p196
    %p198 = scmp.le.s32.totalorder 1, %s12
    %p199 = scmp.lt.s32.totalorder %s12, 5
    %p200 = pnand %p198, %p199
    %p201 = pneg %p200
    // Predicated region
    $region9: #{tpu_custom_call.1} parent=5 // pred_check
      _
    $region10: #{tpu_custom_call.1} parent=5 // pred_check_branch
      %203 = sbr.rel (%p200) target = $region12
    $region11: #{tpu_custom_call.1} parent=5 // pred_region
      %s204 = ssub.s32 %s12, 1
      // Predicated region
      $region13: #{tpu_custom_call.1} parent=11 // pred_check
        %p205 = pneg %p73
      $region14: #{tpu_custom_call.1} parent=11 // pred_check_branch
        %207 = sbr.rel (%p205) target = $region16
      $region15: #{tpu_custom_call.1} parent=11 // pred_region
        _
      $region16: #{tpu_custom_call.1} parent=11 // pred_fallthru
        _
      // Predicated region
      $region17: #{tpu_custom_call.1} parent=11 // pred_check
        %p208 = pneg %p94
      $region18: #{tpu_custom_call.1} parent=11 // pred_check_branch
        %210 = sbr.rel (%p208) target = $region20
      $region19: #{tpu_custom_call.1} parent=11 // pred_region
        _
      $region20: #{tpu_custom_call.1} parent=11 // pred_fallthru
        _
      // Predicated region
      $region21: #{tpu_custom_call.1} parent=11 // pred_check
        %p211 = pneg %p141
      $region22: #{tpu_custom_call.1} parent=11 // pred_check_branch
        %213 = sbr.rel (%p211) target = $region24
      $region23: #{tpu_custom_call.1} parent=11 // pred_region
        _
      $region24: #{tpu_custom_call.1} parent=11 // pred_fallthru
        _
      // Predicated region
      $region25: #{tpu_custom_call.1} parent=11 // pred_check
        %p214 = pneg %p162
      $region26: #{tpu_custom_call.1} parent=11 // pred_check_branch
        %216 = sbr.rel (%p214) target = $region28
      $region27: #{tpu_custom_call.1} parent=11 // pred_region
        _
      $region28: #{tpu_custom_call.1} parent=11 // pred_fallthru
        _
    $region12: #{tpu_custom_call.1} parent=5 // pred_fallthru
      _
    %p217 = scmp.lt.s32.totalorder %s12, 4
    // Predicated region
    $region29: #{tpu_custom_call.1} parent=5 // pred_check
      %p218 = pneg %p217
    $region30: #{tpu_custom_call.1} parent=5 // pred_check_branch
      %220 = sbr.rel (%p218) target = $region32
    $region31: #{tpu_custom_call.1} parent=5 // pred_region
      // Predicated region
      $region33: #{tpu_custom_call.1} parent=31 // pred_check
        %p221 = pneg %p46
      $region34: #{tpu_custom_call.1} parent=31 // pred_check_branch
        %223 = sbr.rel (%p221) target = $region36
      $region35: #{tpu_custom_call.1} parent=31 // pred_region
        %s224 = smul.u32 4, %s20
        %p225 = scmp.lt.s32.totalorder %s19, 1
        %s226 = scalar_select %p225, %s19, 1
        %p227 = scmp.lt.s32.totalorder %s224, 7
        %s228 = scalar_select %p227, %s224, 7
        %s229 = smul.addr %s226, 8
        %s230 = sadd.s32 %s228, %s229
        %s231 = smul.addr %s230, 4
        %s232 = scalar_lea.vmem %s0, %s231
        %s233 = smul.u32 4, %s20
      $region36: #{tpu_custom_call.1} parent=31 // pred_fallthru
        _
      // Predicated region
      $region37: #{tpu_custom_call.1} parent=31 // pred_check
        %p234 = pneg %p114
      $region38: #{tpu_custom_call.1} parent=31 // pred_check_branch
        %236 = sbr.rel (%p234) target = $region40
      $region39: #{tpu_custom_call.1} parent=31 // pred_region
        %p237 = scmp.lt.s32.totalorder %s19, 1
        %s238 = scalar_select %p237, %s19, 1
        %s239 = scalar_lea.vmem %s3, %s238
      $region40: #{tpu_custom_call.1} parent=31 // pred_fallthru
        _
    $region32: #{tpu_custom_call.1} parent=5 // pred_fallthru
      _
    %p240 = scmp.le.s32.totalorder 1, %s12
    %p241 = scmp.lt.s32.totalorder %s12, 5
    %p242 = pnand %p240, %p241
    %p243 = pneg %p242
    // Predicated region
    $region41: #{tpu_custom_call.1} parent=5 // pred_check
      _
    $region42: #{tpu_custom_call.1} parent=5 // pred_check_branch
      %245 = sbr.rel (%p242) target = $region44
    $region43: #{tpu_custom_call.1} parent=5 // pred_region
      %s246 = ssub.s32 %s12, 1
      %s247 = smul.u32 4, %s22
      %p248 = scmp.lt.s32.totalorder %s21, 1
      %s249 = scalar_select %p248, %s21, 1
      %p250 = scmp.lt.s32.totalorder %s247, 7
      %s251 = scalar_select %p250, %s247, 7
      %s252 = smul.addr %s249, 8
      %s253 = sadd.s32 %s251, %s252
      %s254 = smul.addr %s253, 4
      %s255 = scalar_lea.vmem %s0, %s254
      %p256 = pneg %p52
      %p257 = pneg %p49
      %p258 = pneg %p73
      %p259 = pneg %p70
      %p260 = pneg %p94
      %p261 = pneg %p91
      %p262 = scmp.lt.s32.totalorder %s21, 1
      %s263 = scalar_select %p262, %s21, 1
      %s264 = scalar_lea.vmem %s3, %s263
      %p265 = pneg %p120
      %p266 = pneg %p117
      %p267 = pneg %p141
      %p268 = pneg %p138
      %p269 = pneg %p162
      %p270 = pneg %p159
      %p271 = pneg %p190
      %p272 = pneg %p187
      %s273 = smul.u32 4, %s22
      %p274 = scmp.lt.s32.totalorder %s21, 1
      %s275 = scalar_select %p274, %s21, 1
      %p276 = scmp.lt.s32.totalorder %s273, 7
      %s277 = scalar_select %p276, %s273, 7
      %s278 = smul.addr %s275, 8
      %s279 = sadd.s32 %s277, %s278
      %s280 = smul.addr %s279, 4
      %s281 = scalar_lea.vmem %s6, %s280
      %s282 = smul.u32 4, %s22
      %p283 = scmp.lt.s32.totalorder %s21, 1
      %s284 = scalar_select %p283, %s21, 1
      %p285 = scmp.lt.s32.totalorder %s282, 7
      %s286 = scalar_select %p285, %s282, 7
      %s287 = smul.addr %s284, 8
      %s288 = sadd.s32 %s286, %s287
      %s289 = smul.addr %s288, 4
      %s290 = scalar_lea.vmem %s0, %s289
      %s291 = smul.u32 4, %s22
      %p292 = scmp.lt.s32.totalorder %s21, 1
      %s293 = scalar_select %p292, %s21, 1
      %s294 = scalar_lea.vmem %s3, %s293
      %s295 = smul.u32 4, %s22
      %p296 = scmp.lt.s32.totalorder %s21, 1
      %s297 = scalar_select %p296, %s21, 1
      %p298 = scmp.lt.s32.totalorder %s295, 7
      %s299 = scalar_select %p298, %s295, 7
      %s300 = smul.addr %s297, 8
      %s301 = sadd.s32 %s299, %s300
      %s302 = smul.addr %s301, 4
      %s303 = scalar_lea.vmem %s6, %s302
      %s304 = smul.u32 4, %s22
      %v306 = vld [vmem:[%s290] sm:$0xf]
      %v307 = vld [vmem:[%s290 + $0x4] sm:$0xf]
      %v308 = vld [vmem:[%s290 + $0x8] sm:$0xf]
      %v309 = vld [vmem:[%s290 + $0xc] sm:$0xf]
      %v310 = vld [vmem:[%s1] sm:$0xf]
      %v311 = vld [vmem:[%s1 + $0x4] sm:$0xf]
      %v312 = vld [vmem:[%s1 + $0x8] sm:$0xf]
      %v313 = vld [vmem:[%s1 + $0xc] sm:$0xf]
      %v314 = vld [vmem:[%s2] sm:$0x1]
      %v316 = vlaneseq
      %v317 = vshrl.u32 %v316, 7
      %v318 = vsub.s32 0, %v317
      %v319 = vrot.slane %v314, %v318
      %v325 = vunpack.c.l.b16 %v306
      %v326 = vunpack.c.l.b16 %v307
      %v327 = vunpack.c.l.b16 %v308
      %v328 = vunpack.c.l.b16 %v309
      %v329 = vpack.c.b16 %v326, %v325
      %v330 = vpack.c.b16 %v328, %v327
      %v335 = vunpack.c.l.b16 %v310
      %v336 = vunpack.c.l.b16 %v311
      %v337 = vunpack.c.l.b16 %v312
      %v338 = vunpack.c.l.b16 %v313
      %v339 = vpack.c.b16 %v336, %v335
      %v340 = vpack.c.b16 %v338, %v337
      %vm343 = vcmask 261120
      %v345 = vsel %vm343, %v329, 0
      %v348 = vsel %vm343, %v330, 0
      %350 = vmatprep.subr.bf16.mxu0 0
      %351 = vmatpush1.bf16.msra.mxu0 %v339
      %352 = vmatprep.subr.bf16.mxu0 0
      %353 = vmatpush1.bf16.msra.mxu0 %v340
      %354 = vmatprep.subr.bf16.mxu0 0
      %355 = vmatpush1.bf16.msra.mxu0 0
      %356 = vmatprep.subr.bf16.mxu0 0
      %357 = vmatpush1.bf16.msra.mxu0 0
      %358 = vmatprep.subr.bf16.mxu0 0
      %359 = vmatpush1.bf16.msra.mxu0 0
      %360 = vmatprep.subr.bf16.mxu0 0
      %361 = vmatpush1.bf16.msra.mxu0 0
      %362 = vmatprep.subr.bf16.mxu0 0
      %363 = vmatpush1.bf16.msra.mxu0 0
      %364 = vmatprep.subr.bf16.mxu0 0
      %365 = vmatpush1.bf16.msra.mxu0 0
      %366 = vmatprep.subr.bf16.mxu0 0
      %367 = vmatpush1.bf16.msra.mxu0 0
      %368 = vmatprep.subr.bf16.mxu0 0
      %369 = vmatpush1.bf16.msra.mxu0 0
      %370 = vmatprep.subr.bf16.mxu0 0
      %371 = vmatpush1.bf16.msra.mxu0 0
      %372 = vmatprep.subr.bf16.mxu0 0
      %373 = vmatpush1.bf16.msra.mxu0 0
      %374 = vmatprep.subr.bf16.mxu0 0
      %375 = vmatpush1.bf16.msra.mxu0 0
      %376 = vmatprep.subr.bf16.mxu0 0
      %377 = vmatpush1.bf16.msra.mxu0 0
      %378 = vmatprep.subr.bf16.mxu0 0
      %379 = vmatpush1.bf16.msra.mxu0 0
      %380 = vmatprep.subr.bf16.mxu0 0
      %381 = vmatpush1.bf16.msra.mxu0 0
      %382 = vmatprep.mubr.bf16.mxu0 0
      %383 = vmatmul.mubr.bf16.gmra.mrb[0].mxu0 %v345
      %v384 = vpop.f32.mrb[0].mxu0
      %v385 = vadd.f32 %v319, %v384
      %v386 = vpop.f32.mrb[0].mxu0
      %v387 = vpop.f32.mrb[0].mxu0
      %v388 = vadd.f32 %v319, %v387
      %v389 = vpop.f32.mrb[0].mxu0
      %390 = vmatprep.mubr.bf16.mxu0 0
      %391 = vmatmul.mubr.bf16.gmra.mrb[0].mxu0 %v348
      %v392 = vpop.f32.mrb[0].mxu0
      %v393 = vadd.f32 %v319, %v392
      %v394 = vpop.f32.mrb[0].mxu0
      %v395 = vpop.f32.mrb[0].mxu0
      %v396 = vadd.f32 %v319, %v395
      %v397 = vpop.f32.mrb[0].mxu0
      %398 = vdwg.mxu0
      %v399 = vmax.f32 %v385, 0.0
      %v400 = vmax.f32 %v388, 0.0
      %v401 = vmax.f32 %v393, 0.0
      %v402 = vmax.f32 %v396, 0.0
      %v403 = vld [vmem:[%s294] sm:$0x1]
      %v405 = vlaneseq
      %v406 = vshrl.u32 %v405, 7
      %v407 = vsub.s32 0, %v406
      %v408 = vrot.slane %v403, %v407
      %v410 = vmul.f32 %v399, %v408
      %v411 = vmul.f32 %v400, %v408
      %v412 = vmul.f32 %v401, %v408
      %v413 = vmul.f32 %v402, %v408
      %v414 = vpack.c.bf16 %v411, %v410
      %v415 = vpack.c.bf16 %v413, %v412
      %v416 = vld [vmem:[%s4] sm:$0xf]
      %v417 = vld [vmem:[%s4 + $0x4] sm:$0xf]
      %v418 = vld [vmem:[%s4 + $0x8] sm:$0xf]
      %v419 = vld [vmem:[%s4 + $0xc] sm:$0xf]
      %v420 = vld [vmem:[%s4 + $0x10] sm:$0xf]
      %v421 = vld [vmem:[%s4 + $0x14] sm:$0xf]
      %v422 = vld [vmem:[%s4 + $0x18] sm:$0xf]
      %v423 = vld [vmem:[%s4 + $0x1c] sm:$0xf]
      %v424 = vld [vmem:[%s4 + $0x20] sm:$0xf]
      %v425 = vld [vmem:[%s4 + $0x24] sm:$0xf]
      %v426 = vld [vmem:[%s4 + $0x28] sm:$0xf]
      %v427 = vld [vmem:[%s4 + $0x2c] sm:$0xf]
      %v428 = vld [vmem:[%s4 + $0x30] sm:$0xf]
      %v429 = vld [vmem:[%s4 + $0x34] sm:$0xf]
      %v430 = vld [vmem:[%s4 + $0x38] sm:$0xf]
      %v431 = vld [vmem:[%s4 + $0x3c] sm:$0xf]
      %v432 = vld [vmem:[%s5] sm:$0x1]
      %v434 = vlaneseq
      %v435 = vshrl.u32 %v434, 7
      %v436 = vsub.s32 0, %v435
      %v437 = vrot.slane %v432, %v436
      %v455 = vunpack.c.l.b16 %v416
      %v456 = vunpack.c.l.b16 %v417
      %v457 = vunpack.c.l.b16 %v418
      %v458 = vunpack.c.l.b16 %v419
      %v459 = vunpack.c.l.b16 %v420
      %v460 = vunpack.c.l.b16 %v421
      %v461 = vunpack.c.l.b16 %v422
      %v462 = vunpack.c.l.b16 %v423
      %v463 = vunpack.c.l.b16 %v424
      %v464 = vunpack.c.l.b16 %v425
      %v465 = vunpack.c.l.b16 %v426
      %v466 = vunpack.c.l.b16 %v427
      %v467 = vunpack.c.l.b16 %v428
      %v468 = vunpack.c.l.b16 %v429
      %v469 = vunpack.c.l.b16 %v430
      %v470 = vunpack.c.l.b16 %v431
      %v471 = vpack.c.b16 %v456, %v455
      %v472 = vpack.c.b16 %v458, %v457
      %v473 = vpack.c.b16 %v460, %v459
      %v474 = vpack.c.b16 %v462, %v461
      %v475 = vpack.c.b16 %v464, %v463
      %v476 = vpack.c.b16 %v466, %v465
      %v477 = vpack.c.b16 %v468, %v467
      %v478 = vpack.c.b16 %v470, %v469
      %487 = vmatprep.subr.bf16.mxu0 0
      %488 = vmatpush1.bf16.msra.mxu0 %v471
      %489 = vmatprep.subr.bf16.mxu0 0
      %490 = vmatpush1.bf16.msra.mxu0 %v472
      %491 = vmatprep.subr.bf16.mxu0 0
      %492 = vmatpush1.bf16.msra.mxu0 %v473
      %493 = vmatprep.subr.bf16.mxu0 0
      %494 = vmatpush1.bf16.msra.mxu0 %v474
      %495 = vmatprep.subr.bf16.mxu0 0
      %496 = vmatpush1.bf16.msra.mxu0 %v475
      %497 = vmatprep.subr.bf16.mxu0 0
      %498 = vmatpush1.bf16.msra.mxu0 %v476
      %499 = vmatprep.subr.bf16.mxu0 0
      %500 = vmatpush1.bf16.msra.mxu0 %v477
      %501 = vmatprep.subr.bf16.mxu0 0
      %502 = vmatpush1.bf16.msra.mxu0 %v478
      %503 = vmatprep.subr.bf16.mxu0 0
      %504 = vmatpush1.bf16.msra.mxu0 0
      %505 = vmatprep.subr.bf16.mxu0 0
      %506 = vmatpush1.bf16.msra.mxu0 0
      %507 = vmatprep.subr.bf16.mxu0 0
      %508 = vmatpush1.bf16.msra.mxu0 0
      %509 = vmatprep.subr.bf16.mxu0 0
      %510 = vmatpush1.bf16.msra.mxu0 0
      %511 = vmatprep.subr.bf16.mxu0 0
      %512 = vmatpush1.bf16.msra.mxu0 0
      %513 = vmatprep.subr.bf16.mxu0 0
      %514 = vmatpush1.bf16.msra.mxu0 0
      %515 = vmatprep.subr.bf16.mxu0 0
      %516 = vmatpush1.bf16.msra.mxu0 0
      %517 = vmatprep.subr.bf16.mxu0 0
      %518 = vmatpush1.bf16.msra.mxu0 0
      %519 = vmatprep.mubr.bf16.mxu0 0
      %520 = vmatmul.mubr.bf16.gmra.mrb[0].mxu0 %v414
      %v521 = vpop.f32.mrb[0].mxu0
      %v522 = vadd.f32 %v437, %v521
      %v523 = vpop.f32.mrb[0].mxu0
      %v524 = vpop.f32.mrb[0].mxu0
      %v525 = vadd.f32 %v437, %v524
      %v526 = vpop.f32.mrb[0].mxu0
      %527 = vmatprep.mubr.bf16.mxu0 0
      %528 = vmatmul.mubr.bf16.gmra.mrb[0].mxu0 %v415
      %v529 = vpop.f32.mrb[0].mxu0
      %v530 = vadd.f32 %v437, %v529
      %v531 = vpop.f32.mrb[0].mxu0
      %v532 = vpop.f32.mrb[0].mxu0
      %v533 = vadd.f32 %v437, %v532
      %v534 = vpop.f32.mrb[0].mxu0
      %535 = vdwg.mxu0
      %v536 = vpack.c.bf16 %v525, %v522
      %v537 = vpack.c.bf16 %v533, %v530
      %v540 = vunpack.c.l.b16 %v536
      %v541 = vunpack.c.h.b16 %v536
      %v542 = vunpack.c.l.b16 %v537
      %v543 = vunpack.c.h.b16 %v537
      %v544 = vpack.c.b16 %v540, %v540
      %v545 = vpack.c.b16 %v541, %v541
      %v546 = vpack.c.b16 %v542, %v542
      %v547 = vpack.c.b16 %v543, %v543
      %vm552 = vcmask 60416
      %553 = vst.msk [vmem:[%s303] sm:$0xf] %vm552, %v544
      %554 = vst.msk [vmem:[%s303 + $0x4] sm:$0xf] %vm552, %v545
      %555 = vst.msk [vmem:[%s303 + $0x8] sm:$0xf] %vm552, %v546
      %556 = vst.msk [vmem:[%s303 + $0xc] sm:$0xf] %vm552, %v547
      %s557 = smul.u32 4, %s22
      %p558 = scmp.lt.s32.totalorder %s21, 1
      %s559 = scalar_select %p558, %s21, 1
      %p560 = scmp.lt.s32.totalorder %s557, 7
      %s561 = scalar_select %p560, %s557, 7
      %s562 = smul.addr %s559, 8
      %s563 = sadd.s32 %s561, %s562
      %s564 = smul.addr %s563, 4
      %s565 = scalar_lea.vmem %s6, %s564
      // Predicated region
      $region45: #{tpu_custom_call.1} parent=43 // pred_check
        %p566 = pneg %p187
      $region46: #{tpu_custom_call.1} parent=43 // pred_check_branch
        %568 = sbr.rel (%p566) target = $region48
      $region47: #{tpu_custom_call.1} parent=43 // pred_region
        %s569 = smul.u32 4, %s22
      $region48: #{tpu_custom_call.1} parent=43 // pred_fallthru
        _
    $region44: #{tpu_custom_call.1} parent=5 // pred_fallthru
      _
    %p570 = scmp.le.s32.totalorder 2, %s12
    // Predicated region
    $region49: #{tpu_custom_call.1} parent=5 // pred_check
      %p571 = pneg %p570
    $region50: #{tpu_custom_call.1} parent=5 // pred_check_branch
      %573 = sbr.rel (%p571) target = $region52
    $region51: #{tpu_custom_call.1} parent=5 // pred_region
      %s574 = ssub.s32 %s12, 2
      // Predicated region
      $region53: #{tpu_custom_call.1} parent=51 // pred_check
        %p575 = pneg %p193
      $region54: #{tpu_custom_call.1} parent=51 // pred_check_branch
        %577 = sbr.rel (%p575) target = $region56
      $region55: #{tpu_custom_call.1} parent=51 // pred_region
        %s578 = smul.u32 4, %s24
        %p579 = scmp.lt.s32.totalorder %s23, 1
        %s580 = scalar_select %p579, %s23, 1
        %p581 = scmp.lt.s32.totalorder %s578, 7
        %s582 = scalar_select %p581, %s578, 7
        %s583 = smul.addr %s580, 8
        %s584 = sadd.s32 %s582, %s583
        %s585 = smul.addr %s584, 4
        %s586 = scalar_lea.vmem %s6, %s585
      $region56: #{tpu_custom_call.1} parent=51 // pred_fallthru
        _
    $region52: #{tpu_custom_call.1} parent=5 // pred_fallthru
      _
  $region6: #{tpu_custom_call.1} parent=0 // loop_footer
    %s16 = sadd.s32 1, %s12
  $region7: #{tpu_custom_call.1} parent=0 // loop_footer_branch
    %11 = sbr.rel target = $region3
  $region8: #{tpu_custom_call.1} parent=0 // loop_exit
    _

</llo_original>
